<compile_context>
chip_gen: v7x
topology: tpu7x:2x2x1
jax: 0.10.0
libtpu: 0.0.40
codegen_flags: <defaults>
</compile_context>

<pallas_src>
import jax
import jax.numpy as jnp
from jax.experimental import pallas as pl
from jax.experimental.pallas import tpu as pltpu

EPS = 1e-5  # PyTorch InstanceNorm2d default


def genblock_kernel(xlo_ref, xhi_ref, w_ref, g_ref, b_ref, o_ref,
                    sum_ref, ssq_ref):
    # xlo_ref: (1, 1, 4*Cin, Wo+1)  space-to-depth input row h    (bf16)
    # xhi_ref: (1, 1, 4*Cin, Wo+1)  space-to-depth input row h+1  (bf16)
    # w_ref:   (4, Cout, 4*Cin)     per-tap conv weights          (bf16)
    # g_ref, b_ref: (Cout, 1)       InstanceNorm affine params    (f32)
    # o_ref:   (1, Cout, Ho, Wo)    NCHW output block (resident across rows)
    # sum_ref, ssq_ref: (Cout, 1)   f32 running spatial sum / sum of squares
    h = pl.program_id(1)
    _, Cout, Ho, Wo = o_ref.shape

    @pl.when(h == 0)
    def _init():
        sum_ref[...] = jnp.zeros_like(sum_ref)
        ssq_ref[...] = jnp.zeros_like(ssq_ref)

    slab_lo = xlo_ref[0, 0]          # (4*Cin, Wo+1)
    slab_hi = xhi_ref[0, 0]          # (4*Cin, Wo+1)

    # Conv output row h: fused im2col as 4 accumulated tap matmuls on the MXU.
    y = jnp.dot(w_ref[0], slab_lo[:, :Wo], preferred_element_type=jnp.float32)
    y = y + jnp.dot(w_ref[1], slab_lo[:, 1:], preferred_element_type=jnp.float32)
    y = y + jnp.dot(w_ref[2], slab_hi[:, :Wo], preferred_element_type=jnp.float32)
    y = y + jnp.dot(w_ref[3], slab_hi[:, 1:], preferred_element_type=jnp.float32)
    # y: (Cout, Wo) float32

    # Single-pass InstanceNorm statistics (f32).
    sum_ref[...] += jnp.sum(y, axis=1, keepdims=True)
    ssq_ref[...] += jnp.sum(y * y, axis=1, keepdims=True)

    # Stash the unnormalized conv row in the resident NCHW output block.
    o_ref[0, :, h, :] = y.astype(o_ref.dtype)

    # Finalize once per batch element: folded scale/shift + ReLU, in place.
    @pl.when(h == pl.num_programs(1) - 1)
    def _finalize():
        inv_hw = 1.0 / float(Ho * Wo)
        mean = sum_ref[...] * inv_hw                                   # (Cout, 1)
        var = jnp.maximum(ssq_ref[...] * inv_hw - mean * mean, 0.0)
        scale = g_ref[...] * jax.lax.rsqrt(var + EPS)                  # (Cout, 1)
        shift = b_ref[...] - mean * scale                              # (Cout, 1)

        def norm_row(r, carry):
            row = o_ref[0, :, r, :].astype(jnp.float32)                # (Cout, Wo)
            out = jnp.maximum(row * scale + shift, 0.0)
            o_ref[0, :, r, :] = out.astype(o_ref.dtype)
            return carry

        jax.lax.fori_loop(0, Ho, norm_row, None)


def genblock_forward(x_nchw, weight, gamma, beta, *, matmul_dtype=jnp.bfloat16):
    """GENBlock forward (down=True, relu, no dropout).

    x_nchw: (N, Cin, H, W); weight: (Cout, Cin, 4, 4); gamma/beta: (Cout,).
    Returns (N, Cout, H//2, W//2) in x_nchw.dtype (NCHW, no extra transpose).
    """
    N, Cin, H, W = x_nchw.shape
    Cout = weight.shape[0]
    Ho, Wo = H // 2, W // 2
    Hb, Wb = Ho + 1, Wo + 1          # padded, space-to-depth spatial extents
    C2 = 4 * Cin

    # Reflect pad (padding=1, padding_mode='reflect').
    x_pad = jnp.pad(x_nchw, ((0, 0), (0, 0), (1, 1), (1, 1)), mode="reflect")

    # Space-to-depth (factor 2), ~1x HBM traffic (no 4x im2col):
    #   x4[n, hb, (dy*2+dx)*Cin + ci, wb] = x_pad[n, ci, 2*hb+dy, 2*wb+dx]
    x4 = x_pad.reshape(N, Cin, Hb, 2, Wb, 2)
    x4 = x4.transpose(0, 2, 3, 5, 1, 4).reshape(N, Hb, C2, Wb)
    x4 = x4.astype(matmul_dtype)

    # Per-tap weights matching the x4 channel ordering:
    #   w_taps[bh*2+bw, co, (dy*2+dx)*Cin+ci] = weight[co, ci, 2*bh+dy, 2*bw+dx]
    w6 = weight.reshape(Cout, Cin, 2, 2, 2, 2)           # (co, ci, bh, dy, bw, dx)
    w_taps = (w6.transpose(2, 4, 0, 3, 5, 1)
                .reshape(4, Cout, C2).astype(matmul_dtype))

    g2 = gamma.reshape(Cout, 1).astype(jnp.float32)
    b2 = beta.reshape(Cout, 1).astype(jnp.float32)

    out = pl.pallas_call(
        genblock_kernel,
        out_shape=jax.ShapeDtypeStruct((N, Cout, Ho, Wo), x_nchw.dtype),
        grid=(N, Ho),
        in_specs=[
            pl.BlockSpec((1, 1, C2, Wb), lambda n, h: (n, h, 0, 0)),      # row h
            pl.BlockSpec((1, 1, C2, Wb), lambda n, h: (n, h + 1, 0, 0)),  # row h+1
            pl.BlockSpec((4, Cout, C2), lambda n, h: (0, 0, 0)),
            pl.BlockSpec((Cout, 1), lambda n, h: (0, 0)),
            pl.BlockSpec((Cout, 1), lambda n, h: (0, 0)),
        ],
        out_specs=pl.BlockSpec((1, Cout, Ho, Wo), lambda n, h: (n, 0, 0, 0)),
        scratch_shapes=[
            pltpu.VMEM((Cout, 1), jnp.float32),   # running sum
            pltpu.VMEM((Cout, 1), jnp.float32),   # running sum of squares
        ],
        compiler_params=pltpu.CompilerParams(
            dimension_semantics=("parallel", "arbitrary")),
    )(x4, x4, w_taps, g2, b2)

    return out   # already NCHW


def reference_forward(x_nchw, weight, gamma, beta):
    """Plain-JAX reference (conv + instance norm + relu) for validation."""
    x_pad = jnp.pad(x_nchw, ((0, 0), (0, 0), (1, 1), (1, 1)), mode="reflect")
    y = jax.lax.conv_general_dilated(
        x_pad, weight, window_strides=(2, 2), padding="VALID",
        dimension_numbers=("NCHW", "OIHW", "NCHW"))
    mean = y.mean(axis=(2, 3), keepdims=True)
    var = ((y - mean) ** 2).mean(axis=(2, 3), keepdims=True)
    xhat = (y - mean) / jnp.sqrt(var + EPS)
    out = xhat * gamma.reshape(1, -1, 1, 1) + beta.reshape(1, -1, 1, 1)
    return jnp.maximum(out, 0.0)


if __name__ == "__main__":
    key = jax.random.PRNGKey(0)
    k_x, k_w = jax.random.split(key)

    N, Cin, H, W = 2, 4, 16, 16
    Cout = 8

    x = jax.random.normal(k_x, (N, Cin, H, W), dtype=jnp.float32)
    # Conv2d weight (Cout, Cin, 4, 4), bias=False.
    weight = 0.1 * jax.random.normal(k_w, (Cout, Cin, 4, 4), dtype=jnp.float32)
    # InstanceNorm2d affine params (PyTorch init: gamma=1, beta=0).
    gamma = jnp.ones((Cout,), dtype=jnp.float32)
    beta = jnp.zeros((Cout,), dtype=jnp.float32)

    out = jax.block_until_ready(genblock_forward(x, weight, gamma, beta))
    ref = jax.block_until_ready(reference_forward(x, weight, gamma, beta))

    assert out.shape == (N, Cout, H // 2, W // 2), out.shape
    # bf16 MXU operands (f32 accumulation & statistics) => tolerance widened
    # relative to the pure-f32 reference.
    max_err = float(jnp.max(jnp.abs(out - ref)))
    assert jnp.allclose(out, ref, rtol=5e-2, atol=5e-2), max_err

    print("KERNEL_OK")
</pallas_src>

<mosaic_0001>
module attributes {stable_mosaic.version = 11 : i64} {
  func.func @genblock_kernel(%arg0: i32, %arg1: i32, %arg2: memref<1x1x16x9xbf16, #tpu.memory_space<vmem>>, %arg3: memref<1x1x16x9xbf16, #tpu.memory_space<vmem>>, %arg4: memref<4x8x16xbf16, #tpu.memory_space<vmem>>, %arg5: memref<8x1xf32, #tpu.memory_space<vmem>>, %arg6: memref<8x1xf32, #tpu.memory_space<vmem>>, %arg7: memref<1x8x8x8xf32, #tpu.memory_space<vmem>>, %arg8: memref<8x1xf32, #tpu.memory_space<vmem>>, %arg9: memref<8x1xf32, #tpu.memory_space<vmem>>) attributes {dimension_semantics = [#tpu.dimension_semantics<parallel>, #tpu.dimension_semantics<arbitrary>], iteration_bounds = array<i64: 2, 8>, scalar_prefetch = 0 : i64, scratch_operands = 2 : i64, tpu.core_type = #tpu.core_type<tc>, window_params = [{transform_indices = @transform_0, window_bounds = array<i64: 1, 1, 16, 9>}, {transform_indices = @transform_1, window_bounds = array<i64: 1, 1, 16, 9>}, {pipeline_mode = #tpu.pipeline_mode<synchronous>, transform_indices = @transform_2, window_bounds = array<i64: 4, 8, 16>}, {pipeline_mode = #tpu.pipeline_mode<synchronous>, transform_indices = @transform_3, window_bounds = array<i64: 8, 1>}, {pipeline_mode = #tpu.pipeline_mode<synchronous>, transform_indices = @transform_4, window_bounds = array<i64: 8, 1>}, {transform_indices = @transform_5, window_bounds = array<i64: 1, 8, 8, 8>}]} {
    %c0_i32 = arith.constant 0 : i32
    %0 = arith.cmpi eq, %arg1, %c0_i32 : i32
    %1 = arith.extui %0 : i1 to i32
    %c0_i32_0 = arith.constant 0 : i32
    %2 = arith.cmpi ne, %1, %c0_i32_0 : i32
    scf.if %2 {
      %cst_34 = arith.constant 0.000000e+00 : f32
      %44 = vector.broadcast %cst_34 : f32 to vector<8x1xf32>
      %c0_35 = arith.constant 0 : index
      %c0_36 = arith.constant 0 : index
      %45 = vector.load %arg8[%c0_35, %c0_36] : memref<8x1xf32, #tpu.memory_space<vmem>>, vector<8x1xf32>
      tpu.vector_store %arg8[%c0_35, %c0_36], %44 {strides = array<i32>} : memref<8x1xf32, #tpu.memory_space<vmem>>, vector<8x1xf32>,
      %cst_37 = arith.constant 0.000000e+00 : f32
      %46 = vector.broadcast %cst_37 : f32 to vector<8x1xf32>
      %c0_38 = arith.constant 0 : index
      %c0_39 = arith.constant 0 : index
      %47 = vector.load %arg9[%c0_38, %c0_39] : memref<8x1xf32, #tpu.memory_space<vmem>>, vector<8x1xf32>
      tpu.vector_store %arg9[%c0_38, %c0_39], %46 {strides = array<i32>} : memref<8x1xf32, #tpu.memory_space<vmem>>, vector<8x1xf32>,
    } else {
    }
    %c0 = arith.constant 0 : index
    %c0_1 = arith.constant 0 : index
    %c0_2 = arith.constant 0 : index
    %c0_3 = arith.constant 0 : index
    %3 = vector.load %arg2[%c0, %c0_1, %c0_2, %c0_3] : memref<1x1x16x9xbf16, #tpu.memory_space<vmem>>, vector<1x1x16x9xbf16>
    %4 = vector.shape_cast %3 : vector<1x1x16x9xbf16> to vector<16x9xbf16>
    %c0_4 = arith.constant 0 : index
    %c0_5 = arith.constant 0 : index
    %c0_6 = arith.constant 0 : index
    %c0_7 = arith.constant 0 : index
    %5 = vector.load %arg3[%c0_4, %c0_5, %c0_6, %c0_7] : memref<1x1x16x9xbf16, #tpu.memory_space<vmem>>, vector<1x1x16x9xbf16>
    %6 = vector.shape_cast %5 : vector<1x1x16x9xbf16> to vector<16x9xbf16>
    %c0_8 = arith.constant 0 : index
    %c0_9 = arith.constant 0 : index
    %c0_10 = arith.constant 0 : index
    %7 = vector.load %arg4[%c0_8, %c0_9, %c0_10] : memref<4x8x16xbf16, #tpu.memory_space<vmem>>, vector<1x8x16xbf16>
    %8 = vector.shape_cast %7 : vector<1x8x16xbf16> to vector<8x16xbf16>
    %9 = vector.extract_strided_slice %4 {offsets = [0, 0], sizes = [16, 8], strides = [1, 1]} : vector<16x9xbf16> to vector<16x8xbf16>
    %cst = arith.constant dense<0.000000e+00> : vector<8x8xf32>
    %10 = tpu.matmul %8, %9, %cst {dimension_numbers = #tpu.dot_dimension_numbers<[1], [0], [0], [1], [0, 0, 1, 1], [], []>} : vector<8x16xbf16>, vector<16x8xbf16>, vector<8x8xf32> -> vector<8x8xf32>
    %c1 = arith.constant 1 : index
    %c0_11 = arith.constant 0 : index
    %c0_12 = arith.constant 0 : index
    %11 = vector.load %arg4[%c1, %c0_11, %c0_12] : memref<4x8x16xbf16, #tpu.memory_space<vmem>>, vector<1x8x16xbf16>
    %12 = vector.shape_cast %11 : vector<1x8x16xbf16> to vector<8x16xbf16>
    %13 = vector.extract_strided_slice %4 {offsets = [0, 1], sizes = [16, 8], strides = [1, 1]} : vector<16x9xbf16> to vector<16x8xbf16>
    %cst_13 = arith.constant dense<0.000000e+00> : vector<8x8xf32>
    %14 = tpu.matmul %12, %13, %cst_13 {dimension_numbers = #tpu.dot_dimension_numbers<[1], [0], [0], [1], [0, 0, 1, 1], [], []>} : vector<8x16xbf16>, vector<16x8xbf16>, vector<8x8xf32> -> vector<8x8xf32>
    %15 = arith.addf %10, %14 : vector<8x8xf32>
    %c2 = arith.constant 2 : index
    %c0_14 = arith.constant 0 : index
    %c0_15 = arith.constant 0 : index
    %16 = vector.load %arg4[%c2, %c0_14, %c0_15] : memref<4x8x16xbf16, #tpu.memory_space<vmem>>, vector<1x8x16xbf16>
    %17 = vector.shape_cast %16 : vector<1x8x16xbf16> to vector<8x16xbf16>
    %18 = vector.extract_strided_slice %6 {offsets = [0, 0], sizes = [16, 8], strides = [1, 1]} : vector<16x9xbf16> to vector<16x8xbf16>
    %cst_16 = arith.constant dense<0.000000e+00> : vector<8x8xf32>
    %19 = tpu.matmul %17, %18, %cst_16 {dimension_numbers = #tpu.dot_dimension_numbers<[1], [0], [0], [1], [0, 0, 1, 1], [], []>} : vector<8x16xbf16>, vector<16x8xbf16>, vector<8x8xf32> -> vector<8x8xf32>
    %20 = arith.addf %15, %19 : vector<8x8xf32>
    %c3 = arith.constant 3 : index
    %c0_17 = arith.constant 0 : index
    %c0_18 = arith.constant 0 : index
    %21 = vector.load %arg4[%c3, %c0_17, %c0_18] : memref<4x8x16xbf16, #tpu.memory_space<vmem>>, vector<1x8x16xbf16>
    %22 = vector.shape_cast %21 : vector<1x8x16xbf16> to vector<8x16xbf16>
    %23 = vector.extract_strided_slice %6 {offsets = [0, 1], sizes = [16, 8], strides = [1, 1]} : vector<16x9xbf16> to vector<16x8xbf16>
    %cst_19 = arith.constant dense<0.000000e+00> : vector<8x8xf32>
    %24 = tpu.matmul %22, %23, %cst_19 {dimension_numbers = #tpu.dot_dimension_numbers<[1], [0], [0], [1], [0, 0, 1, 1], [], []>} : vector<8x16xbf16>, vector<16x8xbf16>, vector<8x8xf32> -> vector<8x8xf32>
    %25 = arith.addf %20, %24 : vector<8x8xf32>
    %c0_20 = arith.constant 0 : index
    %c0_21 = arith.constant 0 : index
    %26 = vector.load %arg8[%c0_20, %c0_21] : memref<8x1xf32, #tpu.memory_space<vmem>>, vector<8x1xf32>
    %cst_22 = arith.constant dense<0.000000e+00> : vector<8xf32>
    %27 = vector.multi_reduction <add>, %25, %cst_22 [1] : vector<8x8xf32> to vector<8xf32>
    %28 = vector.shape_cast %27 : vector<8xf32> to vector<8x1xf32>
    %29 = arith.addf %26, %28 : vector<8x1xf32>
    %c0_23 = arith.constant 0 : index
    %c0_24 = arith.constant 0 : index
    %30 = vector.load %arg8[%c0_23, %c0_24] : memref<8x1xf32, #tpu.memory_space<vmem>>, vector<8x1xf32>
    tpu.vector_store %arg8[%c0_23, %c0_24], %29 {strides = array<i32>} : memref<8x1xf32, #tpu.memory_space<vmem>>, vector<8x1xf32>,
    %c0_25 = arith.constant 0 : index
    %c0_26 = arith.constant 0 : index
    %31 = vector.load %arg9[%c0_25, %c0_26] : memref<8x1xf32, #tpu.memory_space<vmem>>, vector<8x1xf32>
    %32 = arith.mulf %25, %25 : vector<8x8xf32>
    %cst_27 = arith.constant dense<0.000000e+00> : vector<8xf32>
    %33 = vector.multi_reduction <add>, %32, %cst_27 [1] : vector<8x8xf32> to vector<8xf32>
    %34 = vector.shape_cast %33 : vector<8xf32> to vector<8x1xf32>
    %35 = arith.addf %31, %34 : vector<8x1xf32>
    %c0_28 = arith.constant 0 : index
    %c0_29 = arith.constant 0 : index
    %36 = vector.load %arg9[%c0_28, %c0_29] : memref<8x1xf32, #tpu.memory_space<vmem>>, vector<8x1xf32>
    tpu.vector_store %arg9[%c0_28, %c0_29], %35 {strides = array<i32>} : memref<8x1xf32, #tpu.memory_space<vmem>>, vector<8x1xf32>,
    %c0_30 = arith.constant 0 : index
    %c0_31 = arith.constant 0 : index
    %37 = arith.index_cast %arg1 : i32 to index
    %c0_32 = arith.constant 0 : index
    %38 = vector.load %arg7[%c0_30, %c0_31, %37, %c0_32] : memref<1x8x8x8xf32, #tpu.memory_space<vmem>>, vector<1x8x1x8xf32>
    %39 = vector.shape_cast %38 : vector<1x8x1x8xf32> to vector<8x8xf32>
    %40 = vector.shape_cast %25 : vector<8x8xf32> to vector<1x8x1x8xf32>
    tpu.vector_store %arg7[%c0_30, %c0_31, %37, %c0_32], %40 {strides = array<i32>} : memref<1x8x8x8xf32, #tpu.memory_space<vmem>>, vector<1x8x1x8xf32>,
    %c7_i32 = arith.constant 7 : i32
    %41 = arith.cmpi eq, %arg1, %c7_i32 : i32
    %42 = arith.extui %41 : i1 to i32
    %c0_i32_33 = arith.constant 0 : i32
    %43 = arith.cmpi ne, %42, %c0_i32_33 : i32
    scf.if %43 {
      %c0_34 = arith.constant 0 : index
      %c0_35 = arith.constant 0 : index
      %44 = vector.load %arg8[%c0_34, %c0_35] : memref<8x1xf32, #tpu.memory_space<vmem>>, vector<8x1xf32>
      %cst_36 = arith.constant 1.562500e-02 : f32
      %45 = vector.broadcast %cst_36 : f32 to vector<8x1xf32>
      %46 = arith.mulf %44, %45 : vector<8x1xf32>
      %c0_37 = arith.constant 0 : index
      %c0_38 = arith.constant 0 : index
      %47 = vector.load %arg9[%c0_37, %c0_38] : memref<8x1xf32, #tpu.memory_space<vmem>>, vector<8x1xf32>
      %cst_39 = arith.constant 1.562500e-02 : f32
      %48 = vector.broadcast %cst_39 : f32 to vector<8x1xf32>
      %49 = arith.mulf %47, %48 : vector<8x1xf32>
      %50 = arith.mulf %46, %46 : vector<8x1xf32>
      %51 = arith.subf %49, %50 : vector<8x1xf32>
      %cst_40 = arith.constant 0.000000e+00 : f32
      %52 = vector.broadcast %cst_40 : f32 to vector<8x1xf32>
      %53 = arith.maximumf %51, %52 : vector<8x1xf32>
      %c0_41 = arith.constant 0 : index
      %c0_42 = arith.constant 0 : index
      %54 = vector.load %arg5[%c0_41, %c0_42] : memref<8x1xf32, #tpu.memory_space<vmem>>, vector<8x1xf32>
      %cst_43 = arith.constant 9.99999974E-6 : f32
      %55 = vector.broadcast %cst_43 : f32 to vector<8x1xf32>
      %56 = arith.addf %53, %55 : vector<8x1xf32>
      %57 = math.rsqrt %56 : vector<8x1xf32>
      %58 = arith.mulf %54, %57 : vector<8x1xf32>
      %c0_44 = arith.constant 0 : index
      %c0_45 = arith.constant 0 : index
      %59 = vector.load %arg6[%c0_44, %c0_45] : memref<8x1xf32, #tpu.memory_space<vmem>>, vector<8x1xf32>
      %60 = arith.mulf %46, %58 : vector<8x1xf32>
      %61 = arith.subf %59, %60 : vector<8x1xf32>
      %c0_i32_46 = arith.constant 0 : i32
      %c8_i32 = arith.constant 8 : i32
      %62 = arith.addi %c0_i32_46, %c8_i32 : i32
      %c1_i32 = arith.constant 1 : i32
      scf.for %arg10 = %c0_i32_46 to %62 step %c1_i32  : i32 {
        %c0_48 = arith.constant 0 : index
        %c0_49 = arith.constant 0 : index
        %63 = arith.index_cast %arg10 : i32 to index
        %c0_50 = arith.constant 0 : index
        %64 = vector.load %arg7[%c0_48, %c0_49, %63, %c0_50] : memref<1x8x8x8xf32, #tpu.memory_space<vmem>>, vector<1x8x1x8xf32>
        %65 = vector.shape_cast %64 : vector<1x8x1x8xf32> to vector<8x8xf32>
        %66 = vector.broadcast %58 : vector<8x1xf32> to vector<8x8xf32>
        %67 = arith.mulf %65, %66 : vector<8x8xf32>
        %68 = vector.broadcast %61 : vector<8x1xf32> to vector<8x8xf32>
        %69 = arith.addf %67, %68 : vector<8x8xf32>
        %cst_51 = arith.constant 0.000000e+00 : f32
        %70 = vector.broadcast %cst_51 : f32 to vector<8x8xf32>
        %71 = arith.maximumf %69, %70 : vector<8x8xf32>
        %c0_52 = arith.constant 0 : index
        %c0_53 = arith.constant 0 : index
        %72 = arith.index_cast %arg10 : i32 to index
        %c0_54 = arith.constant 0 : index
        %73 = vector.load %arg7[%c0_52, %c0_53, %72, %c0_54] : memref<1x8x8x8xf32, #tpu.memory_space<vmem>>, vector<1x8x1x8xf32>
        %74 = vector.shape_cast %73 : vector<1x8x1x8xf32> to vector<8x8xf32>
        %75 = vector.shape_cast %71 : vector<8x8xf32> to vector<1x8x1x8xf32>
        tpu.vector_store %arg7[%c0_52, %c0_53, %72, %c0_54], %75 {strides = array<i32>} : memref<1x8x8x8xf32, #tpu.memory_space<vmem>>, vector<1x8x1x8xf32>,
      }
      %c8_i32_47 = arith.constant 8 : i32
    } else {
    }
    return
  }
  func.func @transform_0(%arg0: i32, %arg1: i32) -> (i32, i32, i32, i32) {
    %c0_i32 = arith.constant 0 : i32
    %c0_i32_0 = arith.constant 0 : i32
    %c0_i32_1 = arith.constant 0 : i32
    return %arg0, %arg1, %c0_i32, %c0_i32_0 : i32, i32, i32, i32
  }
  func.func @transform_1(%arg0: i32, %arg1: i32) -> (i32, i32, i32, i32) {
    %c1_i32 = arith.constant 1 : i32
    %0 = arith.addi %arg1, %c1_i32 : i32
    %c0_i32 = arith.constant 0 : i32
    %c0_i32_0 = arith.constant 0 : i32
    %c0_i32_1 = arith.constant 0 : i32
    return %arg0, %0, %c0_i32, %c0_i32_0 : i32, i32, i32, i32
  }
  func.func @transform_2(%arg0: i32, %arg1: i32) -> (i32, i32, i32) {
    %c0_i32 = arith.constant 0 : i32
    %c0_i32_0 = arith.constant 0 : i32
    %c0_i32_1 = arith.constant 0 : i32
    %c0_i32_2 = arith.constant 0 : i32
    return %c0_i32, %c0_i32_0, %c0_i32_1 : i32, i32, i32
  }
  func.func @transform_3(%arg0: i32, %arg1: i32) -> (i32, i32) {
    %c0_i32 = arith.constant 0 : i32
    %c0_i32_0 = arith.constant 0 : i32
    %c0_i32_1 = arith.constant 0 : i32
    return %c0_i32, %c0_i32_0 : i32, i32
  }
  func.func @transform_4(%arg0: i32, %arg1: i32) -> (i32, i32) {
    %c0_i32 = arith.constant 0 : i32
    %c0_i32_0 = arith.constant 0 : i32
    %c0_i32_1 = arith.constant 0 : i32
    return %c0_i32, %c0_i32_0 : i32, i32
  }
  func.func @transform_5(%arg0: i32, %arg1: i32) -> (i32, i32, i32, i32) {
    %c0_i32 = arith.constant 0 : i32
    %c0_i32_0 = arith.constant 0 : i32
    %c0_i32_1 = arith.constant 0 : i32
    %c0_i32_2 = arith.constant 0 : i32
    return %arg0, %c0_i32, %c0_i32_0, %c0_i32_1 : i32, i32, i32, i32
  }
}

</mosaic_0001>

<llo_original>
// kernel: tpu_custom_call.1
$region0: #{tpu_custom_call.1}
  #allocation0 [shape = 'u32[]', space=smem, size = 0x4, offset = 0x4, fixed_abs, tag = 'smem constant byte address 0x4 - core index']
  #allocation1 [shape = 'u32[144,128]{1,0:T(1,128)}', space=vmem, size = 0x12000, scoped, tag = 'internal scratch']
  #allocation2 [shape = 'f32[8,1]{1,0:T(8,128)}', space=vmem, size = 0x1000, scoped, tag = 'scratch operand']
  #allocation3 [shape = 'f32[8,1]{1,0:T(8,128)}', space=vmem, size = 0x1000, scoped, tag = 'scratch operand']
  %s0 = inlined_call_operand.vmem [shape: bf16[2,9,16,9], index: 0, kind: input, shape index: {}]
  %s1 = inlined_call_operand.vmem [shape: bf16[2,9,16,9], index: 1, kind: input, shape index: {}]
  %s2 = inlined_call_operand.vmem [shape: bf16[4,8,16], index: 2, kind: input, shape index: {}]
  %s3 = inlined_call_operand.vmem [shape: f32[8,1], index: 3, kind: input, shape index: {}]
  %s4 = inlined_call_operand.vmem [shape: f32[8,1], index: 4, kind: input, shape index: {}]
  %s5 = inlined_call_operand.hbm [shape: f32[2,8,8,8], index: 5, kind: output, shape index: {}]
  %s6 = sld [smem:[#allocation0]]
  $region68: #{tpu_custom_call.1} parent=0
    _
  %s8 = ssub.s32 1, %s6
  %s9 = scalar_select 0, %s8, %s6
  $region1: #{tpu_custom_call.1} parent=0
    #allocation4 [shape = 'u8[65536]{0}', space=vmem, size = 0x10000, scoped, tag = 'output window, operand 0']
    #allocation5 [shape = 's32[2]{0}', space=sflag, size = 0x8, scoped, tag = 'scoped memory for tpu_custom_call.1']
    %10 = vsyncpa [#allocation5], 0
    %s11 = scalar_lea.sflag [#allocation5], 1
    %12 = vsyncpa %s11, 0
    loop: start=0, step=1, limit=18
    $region2: #{tpu_custom_call.1} parent=1 // loop_pre_header
      _
    $region3: #{tpu_custom_call.1} parent=1 // loop_header
      %s14 = sphi 0, %s18
      %p15 = scmp.ge.s32.totalorder %s14, 18
      %s21 = sphi 0, %s33
      %s22 = sphi 0, %s29
      %s23 = sphi 0, %s21
      %s24 = sphi 0, %s22
      %s25 = sphi 0, %s23
      %s26 = sphi 0, %s24
      %s38 = sphi 0, %s40
      %s41 = sphi 0, %s38
      %s42 = sphi 0, %s41
      %s58 = sphi 0, %s42
      %s68 = sphi 0, %s70
      %s71 = sphi 0, %s68
      %s72 = sphi 0, %s71
      %s88 = sphi 0, %s72
      %s92 = sphi 0, %s92
      %s94 = sphi 0, %s92
      %s95 = sphi 0, %s94
      %s109 = sphi 0, %s95
      %s113 = sphi 0, %s113
      %s115 = sphi 0, %s113
      %s116 = sphi 0, %s115
      %s130 = sphi 0, %s116
      %s134 = sphi 0, %s134
      %s136 = sphi 0, %s134
      %s137 = sphi 0, %s136
      %s151 = sphi 0, %s137
      %s157 = sphi 0, %s159
      %s160 = sphi 0, %s157
      %s161 = sphi 0, %s160
      %s177 = sphi 0, %s161
    $region4: #{tpu_custom_call.1} parent=1 // loop_header_branch
      %17 = sbr.rel (%p15) target = $region8
    $region5: #{tpu_custom_call.1} parent=1 // loop_body
      %s19 = ssub.s32 %s14, 1
      %s20 = ssub.s32 %s14, 2
      %s27 = sadd.s32 1, %s22
      %p28 = scmp.ge.s32.totalorder %s27, 8
      %s29 = scalar_select %p28, 0, %s27
      %s30 = sadd.s32 1, %s21
      %s31 = scalar_select %p28, %s30, %s21
      %p32 = scmp.ge.s32.totalorder %s31, 2
      %s33 = scalar_select %p32, 0, %s31
      %s34 = ssub.s32 %s21, %s33
      %s35 = ssub.s32 %s22, %s29
      %s36 = sor.u32 %s34, %s35
      %p37 = scmp.eq.s32.totalorder %s36, 0
      %s39 = sadd.s32 %s38, 1
      %s40 = scalar_select %p37, %s38, %s39
      %p43 = pneg %p37
      %p44 = scmp.eq.s32.totalorder %s14, 15
      %p45 = por %p43, %p44
      %p46 = scmp.ne.s32.totalorder %s38, %s41
      %p47 = scmp.eq.s32.totalorder %s14, 0
      %p48 = por %p46, %p47
      %p49 = scmp.ne.s32.totalorder %s38, %s41
      %p50 = scmp.eq.s32.totalorder %s19, 15
      %p51 = por %p49, %p50
      %p52 = scmp.ne.s32.totalorder %s41, %s42
      %p53 = scmp.eq.s32.totalorder %s19, 0
      %p54 = por %p52, %p53
      %p55 = scmp.ne.s32.totalorder %s41, %s42
      %p56 = scmp.eq.s32.totalorder %s20, 15
      %p57 = por %p55, %p56
      %p59 = scmp.ne.s32.totalorder %s42, %s58
      %p60 = scmp.eq.s32.totalorder %s20, 0
      %p61 = por %p59, %p60
      %s62 = sadd.s32 %s22, 1
      %s63 = sadd.s32 %s29, 1
      %s64 = ssub.s32 %s21, %s33
      %s65 = ssub.s32 %s62, %s63
      %s66 = sor.u32 %s64, %s65
      %p67 = scmp.eq.s32.totalorder %s66, 0
      %s69 = sadd.s32 %s68, 1
      %s70 = scalar_select %p67, %s68, %s69
      %p73 = pneg %p67
      %p74 = scmp.eq.s32.totalorder %s14, 15
      %p75 = por %p73, %p74
      %p76 = scmp.ne.s32.totalorder %s68, %s71
      %p77 = scmp.eq.s32.totalorder %s14, 0
      %p78 = por %p76, %p77
      %p79 = scmp.ne.s32.totalorder %s68, %s71
      %p80 = scmp.eq.s32.totalorder %s19, 15
      %p81 = por %p79, %p80
      %p82 = scmp.ne.s32.totalorder %s71, %s72
      %p83 = scmp.eq.s32.totalorder %s19, 0
      %p84 = por %p82, %p83
      %p85 = scmp.ne.s32.totalorder %s71, %s72
      %p86 = scmp.eq.s32.totalorder %s20, 15
      %p87 = por %p85, %p86
      %p89 = scmp.ne.s32.totalorder %s72, %s88
      %p90 = scmp.eq.s32.totalorder %s20, 0
      %p91 = por %p89, %p90
      %s93 = sadd.s32 %s92, 1
      %p96 = scmp.eq.s32.totalorder %s14, 15
      %p97 = scmp.ne.s32.totalorder %s92, %s94
      %p98 = scmp.eq.s32.totalorder %s14, 0
      %p99 = por %p97, %p98
      %p100 = scmp.ne.s32.totalorder %s92, %s94
      %p101 = scmp.eq.s32.totalorder %s19, 15
      %p102 = por %p100, %p101
      %p103 = scmp.ne.s32.totalorder %s94, %s95
      %p104 = scmp.eq.s32.totalorder %s19, 0
      %p105 = por %p103, %p104
      %p106 = scmp.ne.s32.totalorder %s94, %s95
      %p107 = scmp.eq.s32.totalorder %s20, 15
      %p108 = por %p106, %p107
      %p110 = scmp.ne.s32.totalorder %s95, %s109
      %p111 = scmp.eq.s32.totalorder %s20, 0
      %p112 = por %p110, %p111
      %s114 = sadd.s32 %s113, 1
      %p117 = scmp.eq.s32.totalorder %s14, 15
      %p118 = scmp.ne.s32.totalorder %s113, %s115
      %p119 = scmp.eq.s32.totalorder %s14, 0
      %p120 = por %p118, %p119
      %p121 = scmp.ne.s32.totalorder %s113, %s115
      %p122 = scmp.eq.s32.totalorder %s19, 15
      %p123 = por %p121, %p122
      %p124 = scmp.ne.s32.totalorder %s115, %s116
      %p125 = scmp.eq.s32.totalorder %s19, 0
      %p126 = por %p124, %p125
      %p127 = scmp.ne.s32.totalorder %s115, %s116
      %p128 = scmp.eq.s32.totalorder %s20, 15
      %p129 = por %p127, %p128
      %p131 = scmp.ne.s32.totalorder %s116, %s130
      %p132 = scmp.eq.s32.totalorder %s20, 0
      %p133 = por %p131, %p132
      %s135 = sadd.s32 %s134, 1
      %p138 = scmp.eq.s32.totalorder %s14, 15
      %p139 = scmp.ne.s32.totalorder %s134, %s136
      %p140 = scmp.eq.s32.totalorder %s14, 0
      %p141 = por %p139, %p140
      %p142 = scmp.ne.s32.totalorder %s134, %s136
      %p143 = scmp.eq.s32.totalorder %s19, 15
      %p144 = por %p142, %p143
      %p145 = scmp.ne.s32.totalorder %s136, %s137
      %p146 = scmp.eq.s32.totalorder %s19, 0
      %p147 = por %p145, %p146
      %p148 = scmp.ne.s32.totalorder %s136, %s137
      %p149 = scmp.eq.s32.totalorder %s20, 15
      %p150 = por %p148, %p149
      %p152 = scmp.ne.s32.totalorder %s137, %s151
      %p153 = scmp.eq.s32.totalorder %s20, 0
      %p154 = por %p152, %p153
      %s155 = ssub.s32 %s21, %s33
      %p156 = scmp.eq.s32.totalorder %s155, 0
      %s158 = sadd.s32 %s157, 1
      %s159 = scalar_select %p156, %s157, %s158
      %p162 = pneg %p156
      %p163 = scmp.eq.s32.totalorder %s14, 15
      %p164 = por %p162, %p163
      %p165 = scmp.ne.s32.totalorder %s157, %s160
      %p166 = scmp.eq.s32.totalorder %s14, 0
      %p167 = por %p165, %p166
      %p168 = scmp.ne.s32.totalorder %s157, %s160
      %p169 = scmp.eq.s32.totalorder %s19, 15
      %p170 = por %p168, %p169
      %p171 = scmp.ne.s32.totalorder %s160, %s161
      %p172 = scmp.eq.s32.totalorder %s19, 0
      %p173 = por %p171, %p172
      %p174 = scmp.ne.s32.totalorder %s160, %s161
      %p175 = scmp.eq.s32.totalorder %s20, 15
      %p176 = por %p174, %p175
      %p178 = scmp.ne.s32.totalorder %s161, %s177
      %p179 = scmp.eq.s32.totalorder %s20, 0
      %p180 = por %p178, %p179
      %p181 = scmp.le.s32.totalorder 1, %s14
      %p182 = scmp.lt.s32.totalorder %s14, 17
      %p183 = pnand %p181, %p182
      %p184 = pneg %p183
      // Predicated region
      $region9: #{tpu_custom_call.1} parent=5 // pred_check
        _
      $region10: #{tpu_custom_call.1} parent=5 // pred_check_branch
        %186 = sbr.rel (%p183) target = $region12
      $region11: #{tpu_custom_call.1} parent=5 // pred_region
        %s187 = ssub.s32 %s14, 1
        // Predicated region
        $region13: #{tpu_custom_call.1} parent=11 // pred_check
          %p188 = pneg %p105
        $region14: #{tpu_custom_call.1} parent=11 // pred_check_branch
          %190 = sbr.rel (%p188) target = $region16
        $region15: #{tpu_custom_call.1} parent=11 // pred_region
          _
        $region16: #{tpu_custom_call.1} parent=11 // pred_fallthru
          _
        // Predicated region
        $region17: #{tpu_custom_call.1} parent=11 // pred_check
          %p191 = pneg %p126
        $region18: #{tpu_custom_call.1} parent=11 // pred_check_branch
          %193 = sbr.rel (%p191) target = $region20
        $region19: #{tpu_custom_call.1} parent=11 // pred_region
          _
        $region20: #{tpu_custom_call.1} parent=11 // pred_fallthru
          _
        // Predicated region
        $region21: #{tpu_custom_call.1} parent=11 // pred_check
          %p194 = pneg %p147
        $region22: #{tpu_custom_call.1} parent=11 // pred_check_branch
          %196 = sbr.rel (%p194) target = $region24
        $region23: #{tpu_custom_call.1} parent=11 // pred_region
          _
        $region24: #{tpu_custom_call.1} parent=11 // pred_fallthru
          _
      $region12: #{tpu_custom_call.1} parent=5 // pred_fallthru
        _
      %p197 = scmp.lt.s32.totalorder %s14, 16
      // Predicated region
      $region25: #{tpu_custom_call.1} parent=5 // pred_check
        %p198 = pneg %p197
      $region26: #{tpu_custom_call.1} parent=5 // pred_check_branch
        %200 = sbr.rel (%p198) target = $region28
      $region27: #{tpu_custom_call.1} parent=5 // pred_region
        // Predicated region
        $region29: #{tpu_custom_call.1} parent=27 // pred_check
          %p201 = pneg %p48
        $region30: #{tpu_custom_call.1} parent=27 // pred_check_branch
          %203 = sbr.rel (%p201) target = $region32
        $region31: #{tpu_custom_call.1} parent=27 // pred_region
          %p204 = scmp.lt.s32.totalorder %s21, 1
          %s205 = scalar_select %p204, %s21, 1
          %p206 = scmp.lt.s32.totalorder %s22, 8
          %s207 = scalar_select %p206, %s22, 8
          %s208 = smul.addr %s207, 2
          %s209 = smul.addr %s205, 18
          %s210 = sadd.s32 %s208, %s209
          %s211 = smul.addr %s210, 4
          %s212 = scalar_lea.vmem %s0, %s211
        $region32: #{tpu_custom_call.1} parent=27 // pred_fallthru
          _
        // Predicated region
        $region33: #{tpu_custom_call.1} parent=27 // pred_check
          %p213 = pneg %p78
        $region34: #{tpu_custom_call.1} parent=27 // pred_check_branch
          %215 = sbr.rel (%p213) target = $region36
        $region35: #{tpu_custom_call.1} parent=27 // pred_region
          %s216 = sadd.s32 %s22, 1
          %p217 = scmp.lt.s32.totalorder %s21, 1
          %s218 = scalar_select %p217, %s21, 1
          %p219 = scmp.lt.s32.totalorder %s216, 8
          %s220 = scalar_select %p219, %s216, 8
          %s221 = smul.addr %s220, 2
          %s222 = smul.addr %s218, 18
          %s223 = sadd.s32 %s221, %s222
          %s224 = smul.addr %s223, 4
          %s225 = scalar_lea.vmem %s1, %s224
          %s226 = sadd.s32 %s22, 1
        $region36: #{tpu_custom_call.1} parent=27 // pred_fallthru
          _
      $region28: #{tpu_custom_call.1} parent=5 // pred_fallthru
        _
      %p227 = scmp.le.s32.totalorder 1, %s14
      %p228 = scmp.lt.s32.totalorder %s14, 17
      %p229 = pnand %p227, %p228
      %p230 = pneg %p229
      // Predicated region
      $region37: #{tpu_custom_call.1} parent=5 // pred_check
        _
      $region38: #{tpu_custom_call.1} parent=5 // pred_check_branch
        %232 = sbr.rel (%p229) target = $region40
      $region39: #{tpu_custom_call.1} parent=5 // pred_region
        %s233 = ssub.s32 %s14, 1
        %p234 = scmp.lt.s32.totalorder %s23, 1
        %s235 = scalar_select %p234, %s23, 1
        %p236 = scmp.lt.s32.totalorder %s24, 8
        %s237 = scalar_select %p236, %s24, 8
        %s238 = smul.addr %s237, 2
        %s239 = smul.addr %s235, 18
        %s240 = sadd.s32 %s238, %s239
        %s241 = smul.addr %s240, 4
        %s242 = scalar_lea.vmem %s0, %s241
        %p243 = pneg %p54
        %p244 = pneg %p51
        %s245 = sadd.s32 %s24, 1
        %p246 = scmp.lt.s32.totalorder %s23, 1
        %s247 = scalar_select %p246, %s23, 1
        %p248 = scmp.lt.s32.totalorder %s245, 8
        %s249 = scalar_select %p248, %s245, 8
        %s250 = smul.addr %s249, 2
        %s251 = smul.addr %s247, 18
        %s252 = sadd.s32 %s250, %s251
        %s253 = smul.addr %s252, 4
        %s254 = scalar_lea.vmem %s1, %s253
        %p255 = pneg %p84
        %p256 = pneg %p81
        %p257 = pneg %p105
        %p258 = pneg %p102
        %p259 = pneg %p126
        %p260 = pneg %p123
        %p261 = pneg %p147
        %p262 = pneg %p144
        %p263 = pneg %p173
        %p264 = pneg %p170
        %s265 = sand.u32 %s160, 1
        %s266 = scalar_lea.sflag [#allocation5], %s265
        %s267 = sand.u32 %s160, 1
        %s268 = smul.addr %s267, 64
        %s269 = scalar_lea.vmem [#allocation4], %s268
        %p270 = scmp.lt.s32.totalorder %s23, 1
        %s271 = scalar_select %p270, %s23, 1
        %p272 = scmp.lt.s32.totalorder %s24, 8
        %s273 = scalar_select %p272, %s24, 8
        %s274 = smul.addr %s273, 2
        %s275 = smul.addr %s271, 18
        %s276 = sadd.s32 %s274, %s275
        %s277 = smul.addr %s276, 4
        %s278 = scalar_lea.vmem %s0, %s277
        %s279 = sadd.s32 %s24, 1
        %p280 = scmp.lt.s32.totalorder %s23, 1
        %s281 = scalar_select %p280, %s23, 1
        %p282 = scmp.lt.s32.totalorder %s279, 8
        %s283 = scalar_select %p282, %s279, 8
        %s284 = smul.addr %s283, 2
        %s285 = smul.addr %s281, 18
        %s286 = sadd.s32 %s284, %s285
        %s287 = smul.addr %s286, 4
        %s288 = scalar_lea.vmem %s1, %s287
        %s289 = sadd.s32 %s24, 1
        %p291 = scmp.eq.s32.totalorder %s24, 0
        // Predicated region
        $region41: #{tpu_custom_call.1} parent=39 // pred_check
          %p292 = pneg %p291
        $region42: #{tpu_custom_call.1} parent=39 // pred_check_branch
          %294 = sbr.rel (%p292) target = $region44
        $region43: #{tpu_custom_call.1} parent=39 // pred_region
          %vm295 = vcmask 7168
          %296 = vst.msk [vmem:[#allocation2] sm:$0xff] %vm295, 0.0
          %297 = vst.msk [vmem:[#allocation3] sm:$0xff] %vm295, 0.0
        $region44: #{tpu_custom_call.1} parent=39 // pred_fallthru
          _
        %v298 = vld [vmem:[%s278] sm:$0xf]
        %v299 = vld [vmem:[%s278 + $0x4] sm:$0xf]
        %v300 = vld [vmem:[%s288] sm:$0xf]
        %v301 = vld [vmem:[%s288 + $0x4] sm:$0xf]
        %v302 = vld [vmem:[%s2] sm:$0xf]
        %s303 = scalar_lea.vmem %s2, 4
        %v304 = vld [vmem:[%s303] sm:$0xf]
        %v307 = vunpack.c.l.b16 %v298
        %v308 = vunpack.c.l.b16 %v299
        %v309 = vpack.c.b16 %v308, %v307
        %310 = vrot.lane.b32.xlu0 %v309, 127
        %v311 = vpop.permute.xlu0 %310
        %vm313 = vcmask 130048
        %v315 = vsel %vm313, %v304, 0
        %317 = vmatprep.subr.bf16.mxu0 0
        %318 = vmatpush1.bf16.msra.mxu0 %v311
        %319 = vmatprep.subr.bf16.mxu0 0
        %320 = vmatpush1.bf16.msra.mxu0 0
        %321 = vmatprep.subr.bf16.mxu0 0
        %322 = vmatpush1.bf16.msra.mxu0 0
        %323 = vmatprep.subr.bf16.mxu0 0
        %324 = vmatpush1.bf16.msra.mxu0 0
        %325 = vmatprep.subr.bf16.mxu0 0
        %326 = vmatpush1.bf16.msra.mxu0 0
        %327 = vmatprep.subr.bf16.mxu0 0
        %328 = vmatpush1.bf16.msra.mxu0 0
        %329 = vmatprep.subr.bf16.mxu0 0
        %330 = vmatpush1.bf16.msra.mxu0 0
        %331 = vmatprep.subr.bf16.mxu0 0
        %332 = vmatpush1.bf16.msra.mxu0 0
        %333 = vmatprep.subr.bf16.mxu0 0
        %334 = vmatpush1.bf16.msra.mxu0 0
        %335 = vmatprep.subr.bf16.mxu0 0
        %336 = vmatpush1.bf16.msra.mxu0 0
        %337 = vmatprep.subr.bf16.mxu0 0
        %338 = vmatpush1.bf16.msra.mxu0 0
        %339 = vmatprep.subr.bf16.mxu0 0
        %340 = vmatpush1.bf16.msra.mxu0 0
        %341 = vmatprep.subr.bf16.mxu0 0
        %342 = vmatpush1.bf16.msra.mxu0 0
        %343 = vmatprep.subr.bf16.mxu0 0
        %344 = vmatpush1.bf16.msra.mxu0 0
        %345 = vmatprep.subr.bf16.mxu0 0
        %346 = vmatpush1.bf16.msra.mxu0 0
        %347 = vmatprep.subr.bf16.mxu0 0
        %348 = vmatpush1.bf16.msra.mxu0 0
        %349 = vmatprep.mubr.bf16.mxu0 0
        %350 = vmatmul.mubr.bf16.gmra.mrb[0].mxu0 %v315
        %v351 = vpop.f32.mrb[0].mxu0
        %v352 = vadd.f32 0.0, %v351
        %v353 = vpop.f32.mrb[0].mxu0
        %v354 = vpop.f32.mrb[0].mxu0
        %v355 = vpop.f32.mrb[0].mxu0
        %356 = vdwg.mxu0
        %v359 = vsel %vm313, %v302, 0
        %361 = vmatprep.subr.bf16.mxu0 0
        %362 = vmatpush1.bf16.msra.mxu0 %v309
        %363 = vmatprep.subr.bf16.mxu0 0
        %364 = vmatpush1.bf16.msra.mxu0 0
        %365 = vmatprep.subr.bf16.mxu0 0
        %366 = vmatpush1.bf16.msra.mxu0 0
        %367 = vmatprep.subr.bf16.mxu0 0
        %368 = vmatpush1.bf16.msra.mxu0 0
        %369 = vmatprep.subr.bf16.mxu0 0
        %370 = vmatpush1.bf16.msra.mxu0 0
        %371 = vmatprep.subr.bf16.mxu0 0
        %372 = vmatpush1.bf16.msra.mxu0 0
        %373 = vmatprep.subr.bf16.mxu0 0
        %374 = vmatpush1.bf16.msra.mxu0 0
        %375 = vmatprep.subr.bf16.mxu0 0
        %376 = vmatpush1.bf16.msra.mxu0 0
        %377 = vmatprep.subr.bf16.mxu0 0
        %378 = vmatpush1.bf16.msra.mxu0 0
        %379 = vmatprep.subr.bf16.mxu0 0
        %380 = vmatpush1.bf16.msra.mxu0 0
        %381 = vmatprep.subr.bf16.mxu0 0
        %382 = vmatpush1.bf16.msra.mxu0 0
        %383 = vmatprep.subr.bf16.mxu0 0
        %384 = vmatpush1.bf16.msra.mxu0 0
        %385 = vmatprep.subr.bf16.mxu0 0
        %386 = vmatpush1.bf16.msra.mxu0 0
        %387 = vmatprep.subr.bf16.mxu0 0
        %388 = vmatpush1.bf16.msra.mxu0 0
        %389 = vmatprep.subr.bf16.mxu0 0
        %390 = vmatpush1.bf16.msra.mxu0 0
        %391 = vmatprep.subr.bf16.mxu0 0
        %392 = vmatpush1.bf16.msra.mxu0 0
        %393 = vmatprep.mubr.bf16.mxu0 0
        %394 = vmatmul.mubr.bf16.gmra.mrb[0].mxu0 %v359
        %v395 = vpop.f32.mrb[0].mxu0
        %v396 = vadd.f32 %v352, %v395
        %v397 = vpop.f32.mrb[0].mxu0
        %v398 = vpop.f32.mrb[0].mxu0
        %v399 = vpop.f32.mrb[0].mxu0
        %400 = vdwg.mxu0
        %s401 = scalar_lea.vmem %s2, 8
        %v402 = vld [vmem:[%s401] sm:$0xf]
        %v405 = vunpack.c.l.b16 %v300
        %v406 = vunpack.c.l.b16 %v301
        %v407 = vpack.c.b16 %v406, %v405
        %v410 = vsel %vm313, %v402, 0
        %412 = vmatprep.subr.bf16.mxu0 0
        %413 = vmatpush1.bf16.msra.mxu0 %v407
        %414 = vmatprep.subr.bf16.mxu0 0
        %415 = vmatpush1.bf16.msra.mxu0 0
        %416 = vmatprep.subr.bf16.mxu0 0
        %417 = vmatpush1.bf16.msra.mxu0 0
        %418 = vmatprep.subr.bf16.mxu0 0
        %419 = vmatpush1.bf16.msra.mxu0 0
        %420 = vmatprep.subr.bf16.mxu0 0
        %421 = vmatpush1.bf16.msra.mxu0 0
        %422 = vmatprep.subr.bf16.mxu0 0
        %423 = vmatpush1.bf16.msra.mxu0 0
        %424 = vmatprep.subr.bf16.mxu0 0
        %425 = vmatpush1.bf16.msra.mxu0 0
        %426 = vmatprep.subr.bf16.mxu0 0
        %427 = vmatpush1.bf16.msra.mxu0 0
        %428 = vmatprep.subr.bf16.mxu0 0
        %429 = vmatpush1.bf16.msra.mxu0 0
        %430 = vmatprep.subr.bf16.mxu0 0
        %431 = vmatpush1.bf16.msra.mxu0 0
        %432 = vmatprep.subr.bf16.mxu0 0
        %433 = vmatpush1.bf16.msra.mxu0 0
        %434 = vmatprep.subr.bf16.mxu0 0
        %435 = vmatpush1.bf16.msra.mxu0 0
        %436 = vmatprep.subr.bf16.mxu0 0
        %437 = vmatpush1.bf16.msra.mxu0 0
        %438 = vmatprep.subr.bf16.mxu0 0
        %439 = vmatpush1.bf16.msra.mxu0 0
        %440 = vmatprep.subr.bf16.mxu0 0
        %441 = vmatpush1.bf16.msra.mxu0 0
        %442 = vmatprep.subr.bf16.mxu0 0
        %443 = vmatpush1.bf16.msra.mxu0 0
        %444 = vmatprep.mubr.bf16.mxu0 0
        %445 = vmatmul.mubr.bf16.gmra.mrb[0].mxu0 %v410
        %v446 = vpop.f32.mrb[0].mxu0
        %v447 = vadd.f32 0.0, %v446
        %v448 = vpop.f32.mrb[0].mxu0
        %v449 = vpop.f32.mrb[0].mxu0
        %v450 = vpop.f32.mrb[0].mxu0
        %451 = vdwg.mxu0
        %v452 = vadd.f32 %v396, %v447
        %s453 = scalar_lea.vmem %s2, 12
        %v454 = vld [vmem:[%s453] sm:$0xf]
        %455 = vrot.lane.b32.xlu0 %v407, 127
        %v456 = vpop.permute.xlu0 %455
        %v459 = vsel %vm313, %v454, 0
        %461 = vmatprep.subr.bf16.mxu0 0
        %462 = vmatpush1.bf16.msra.mxu0 %v456
        %463 = vmatprep.subr.bf16.mxu0 0
        %464 = vmatpush1.bf16.msra.mxu0 0
        %465 = vmatprep.subr.bf16.mxu0 0
        %466 = vmatpush1.bf16.msra.mxu0 0
        %467 = vmatprep.subr.bf16.mxu0 0
        %468 = vmatpush1.bf16.msra.mxu0 0
        %469 = vmatprep.subr.bf16.mxu0 0
        %470 = vmatpush1.bf16.msra.mxu0 0
        %471 = vmatprep.subr.bf16.mxu0 0
        %472 = vmatpush1.bf16.msra.mxu0 0
        %473 = vmatprep.subr.bf16.mxu0 0
        %474 = vmatpush1.bf16.msra.mxu0 0
        %475 = vmatprep.subr.bf16.mxu0 0
        %476 = vmatpush1.bf16.msra.mxu0 0
        %477 = vmatprep.subr.bf16.mxu0 0
        %478 = vmatpush1.bf16.msra.mxu0 0
        %479 = vmatprep.subr.bf16.mxu0 0
        %480 = vmatpush1.bf16.msra.mxu0 0
        %481 = vmatprep.subr.bf16.mxu0 0
        %482 = vmatpush1.bf16.msra.mxu0 0
        %483 = vmatprep.subr.bf16.mxu0 0
        %484 = vmatpush1.bf16.msra.mxu0 0
        %485 = vmatprep.subr.bf16.mxu0 0
        %486 = vmatpush1.bf16.msra.mxu0 0
        %487 = vmatprep.subr.bf16.mxu0 0
        %488 = vmatpush1.bf16.msra.mxu0 0
        %489 = vmatprep.subr.bf16.mxu0 0
        %490 = vmatpush1.bf16.msra.mxu0 0
        %491 = vmatprep.subr.bf16.mxu0 0
        %492 = vmatpush1.bf16.msra.mxu0 0
        %493 = vmatprep.mubr.bf16.mxu0 0
        %494 = vmatmul.mubr.bf16.gmra.mrb[0].mxu0 %v459
        %v495 = vpop.f32.mrb[0].mxu0
        %v496 = vadd.f32 0.0, %v495
        %v497 = vpop.f32.mrb[0].mxu0
        %v498 = vpop.f32.mrb[0].mxu0
        %v499 = vpop.f32.mrb[0].mxu0
        %500 = vdwg.mxu0
        %v501 = vadd.f32 %v452, %v496
        %v502 = vld [vmem:[#allocation2] sm:$0xff]
        %vm503 = vcmask 64512
        %v504 = vsel %vm503, %v501, 0.0
        %505 = vadd.xlane.f32.xlu0 %v504
        %v506 = vpop.xlane.xlu0 %505
        %v507 = vadd.f32 %v502, %v506
        %vm508 = vcmask 7168
        %509 = vst.msk [vmem:[#allocation2] sm:$0xff] %vm508, %v507
        %v510 = vld [vmem:[#allocation3] sm:$0xff]
        %v511 = vmul.f32 %v501, %v501
        %v512 = vsel %vm503, %v511, 0.0
        %513 = vadd.xlane.f32.xlu0 %v512
        %v514 = vpop.xlane.xlu0 %513
        %v515 = vadd.f32 %v510, %v514
        %516 = vst.msk [vmem:[#allocation3] sm:$0xff] %vm508, %v515
        %v518 = vcombine.high %v501, %v501
        %v520 = vunpack.c.l.s4 1966171168
        %v521 = vunpack.c.0.s8 %v520
        %v522 = vlaneseq
        %v523 = vshrl.u32 %v522, 7
        %v524 = vsub.s32 %v521, %v523
        %v525 = vrot.slane %v501, %v524
        %v527 = vunpack.c.l.s4 1966171168
        %v528 = vunpack.c.0.s8 %v527
        %v529 = vlaneseq
        %v530 = vshrl.u32 %v529, 7
        %v531 = vsub.s32 %v528, %v530
        %v532 = vrot.slane %v518, %v531
        %v533 = vcombine.high %v525, %v525
        %v534 = vcombine.high %v532, %v532
        %v536 = vunpack.c.l.s4 1966171168
        %v537 = vunpack.c.0.s8 %v536
        %v538 = vlaneseq
        %v539 = vshrl.u32 %v538, 7
        %v540 = vsub.s32 %v537, %v539
        %v541 = vrot.slane %v525, %v540
        %v543 = vunpack.c.l.s4 1966171168
        %v544 = vunpack.c.0.s8 %v543
        %v545 = vlaneseq
        %v546 = vshrl.u32 %v545, 7
        %v547 = vsub.s32 %v544, %v546
        %v548 = vrot.slane %v532, %v547
        %v550 = vunpack.c.l.s4 1966171168
        %v551 = vunpack.c.0.s8 %v550
        %v552 = vlaneseq
        %v553 = vshrl.u32 %v552, 7
        %v554 = vsub.s32 %v551, %v553
        %v555 = vrot.slane %v533, %v554
        %v557 = vunpack.c.l.s4 1966171168
        %v558 = vunpack.c.0.s8 %v557
        %v559 = vlaneseq
        %v560 = vshrl.u32 %v559, 7
        %v561 = vsub.s32 %v558, %v560
        %v562 = vrot.slane %v534, %v561
        %v563 = vcombine.high %v541, %v541
        %v564 = vcombine.high %v548, %v548
        %v565 = vcombine.high %v555, %v555
        %v566 = vcombine.high %v562, %v562
        %s575 = scalar_lea.vmem %s269, %s24 [#allocation4]
        %vm576 = vcmask 57344
        %577 = vst.msk [vmem:[%s575] sm:$0x1] %vm576, %v541
        %578 = vst.msk [vmem:[%s575 + $0x8] sm:$0x1] %vm576, %v555
        %579 = vst.msk [vmem:[%s575 + $0x10] sm:$0x1] %vm576, %v563
        %580 = vst.msk [vmem:[%s575 + $0x18] sm:$0x1] %vm576, %v565
        %581 = vst.msk [vmem:[%s575 + $0x20] sm:$0x1] %vm576, %v548
        %582 = vst.msk [vmem:[%s575 + $0x28] sm:$0x1] %vm576, %v562
        %583 = vst.msk [vmem:[%s575 + $0x30] sm:$0x1] %vm576, %v564
        %584 = vst.msk [vmem:[%s575 + $0x38] sm:$0x1] %vm576, %v566
        %p585 = scmp.eq.s32.totalorder %s24, 7
        // Predicated region
        $region45: #{tpu_custom_call.1} parent=39 // pred_check
          %p586 = pneg %p585
        $region46: #{tpu_custom_call.1} parent=39 // pred_check_branch
          %588 = sbr.rel (%p586) target = $region48
        $region47: #{tpu_custom_call.1} parent=39 // pred_region
          %v589 = vld [vmem:[#allocation2] sm:$0xff]
          %v590 = vmul.f32 %v589, 0.015625
          %v591 = vld [vmem:[#allocation3] sm:$0xff]
          %v592 = vmul.f32 %v591, 0.015625
          %v593 = vmul.f32 %v590, %v590
          %v594 = vsub.f32 %v592, %v593
          %v595 = vmax.f32 %v594, 0.0
          %v596 = vld [vmem:[%s3] sm:$0xff]
          %v597 = vadd.f32 %v595, 1e-05
          %v598 = vrsqrt.pop %v597
          %v599 = vmul.f32 %v596, %v598
          %v600 = vld [vmem:[%s4] sm:$0xff]
          %v601 = vmul.f32 %v590, %v599
          %v602 = vsub.f32 %v600, %v601
          loop: start=0, step=1, limit=8
          $region49: #{tpu_custom_call.1} parent=47 // loop_pre_header
            _
          $region50: #{tpu_custom_call.1} parent=47 // loop_header
            %s604 = sphi 0, %s608
            %p605 = scmp.ge.s32.totalorder %s604, 8
          $region51: #{tpu_custom_call.1} parent=47 // loop_header_branch
            %607 = sbr.rel (%p605) target = $region55
          $region52: #{tpu_custom_call.1} parent=47 // loop_body
            %s609 = scalar_lea.vmem %s269, %s604 [#allocation4]
            %v610 = vld [vmem:[%s609] sm:$0x1]
            %v611 = vld [vmem:[%s609 + $0x8] sm:$0x1]
            %v612 = vld [vmem:[%s609 + $0x10] sm:$0x1]
            %v613 = vld [vmem:[%s609 + $0x18] sm:$0x1]
            %v614 = vld [vmem:[%s609 + $0x20] sm:$0x1]
            %v615 = vld [vmem:[%s609 + $0x28] sm:$0x1]
            %v616 = vld [vmem:[%s609 + $0x30] sm:$0x1]
            %v617 = vld [vmem:[%s609 + $0x38] sm:$0x1]
            %619 = vset.pattern.permute.xlu0 0
            %620 = vperm.xlu0 %619, %v599
            %v621 = vpop.permute.xlu0 %620
            %v622 = vrot.slane %v621, 1
            %v623 = vrot.slane %v621, 2
            %v624 = vrot.slane %v621, 3
            %v625 = vrot.slane %v621, 4
            %v626 = vrot.slane %v621, 5
            %v627 = vrot.slane %v621, 6
            %v628 = vrot.slane %v621, 7
            %v637 = vmul.f32 %v610, %v621
            %v638 = vmul.f32 %v611, %v622
            %v639 = vmul.f32 %v612, %v623
            %v640 = vmul.f32 %v613, %v624
            %v641 = vmul.f32 %v614, %v625
            %v642 = vmul.f32 %v615, %v626
            %v643 = vmul.f32 %v616, %v627
            %v644 = vmul.f32 %v617, %v628
            %646 = vset.pattern.permute.xlu0 0
            %647 = vperm.xlu0 %646, %v602
            %v648 = vpop.permute.xlu0 %647
            %v649 = vrot.slane %v648, 1
            %v650 = vrot.slane %v648, 2
            %v651 = vrot.slane %v648, 3
            %v652 = vrot.slane %v648, 4
            %v653 = vrot.slane %v648, 5
            %v654 = vrot.slane %v648, 6
            %v655 = vrot.slane %v648, 7
            %v664 = vadd.f32 %v637, %v648
            %v665 = vadd.f32 %v638, %v649
            %v666 = vadd.f32 %v639, %v650
            %v667 = vadd.f32 %v640, %v651
            %v668 = vadd.f32 %v641, %v652
            %v669 = vadd.f32 %v642, %v653
            %v670 = vadd.f32 %v643, %v654
            %v671 = vadd.f32 %v644, %v655
            %v672 = vmax.f32 %v664, 0.0
            %v673 = vmax.f32 %v665, 0.0
            %v674 = vmax.f32 %v666, 0.0
            %v675 = vmax.f32 %v667, 0.0
            %v676 = vmax.f32 %v668, 0.0
            %v677 = vmax.f32 %v669, 0.0
            %v678 = vmax.f32 %v670, 0.0
            %v679 = vmax.f32 %v671, 0.0
            %680 = vst.msk [vmem:[%s609] sm:$0x1] %vm576, %v672
            %681 = vst.msk [vmem:[%s609 + $0x8] sm:$0x1] %vm576, %v673
            %682 = vst.msk [vmem:[%s609 + $0x10] sm:$0x1] %vm576, %v674
            %683 = vst.msk [vmem:[%s609 + $0x18] sm:$0x1] %vm576, %v675
            %684 = vst.msk [vmem:[%s609 + $0x20] sm:$0x1] %vm576, %v676
            %685 = vst.msk [vmem:[%s609 + $0x28] sm:$0x1] %vm576, %v677
            %686 = vst.msk [vmem:[%s609 + $0x30] sm:$0x1] %vm576, %v678
            %687 = vst.msk [vmem:[%s609 + $0x38] sm:$0x1] %vm576, %v679
          $region53: #{tpu_custom_call.1} parent=47 // loop_footer
            %s608 = sadd.s32 1, %s604
          $region54: #{tpu_custom_call.1} parent=47 // loop_footer_branch
            %603 = sbr.rel target = $region50
          $region55: #{tpu_custom_call.1} parent=47 // loop_exit
            _
        $region48: #{tpu_custom_call.1} parent=39 // pred_fallthru
          _
        %s688 = sand.u32 %s160, 1
        %s689 = scalar_lea.sflag [#allocation5], %s688
        %s690 = sand.u32 %s160, 1
        %s691 = smul.addr %s690, 64
        %s692 = scalar_lea.vmem [#allocation4], %s691
        // Predicated region
        $region56: #{tpu_custom_call.1} parent=39 // pred_check
          %p693 = pneg %p170
        $region57: #{tpu_custom_call.1} parent=39 // pred_check_branch
          %695 = sbr.rel (%p693) target = $region59
        $region58: #{tpu_custom_call.1} parent=39 // pred_region
          %s697 = ssub.s32 1024, 1024
          %698 = vsyncadd %s689, %s697
          %s699 = smul.addr %s23, 8
          %s700 = smul.addr %s699, 128
          %s701 = scalar_lea.hbm %s5, %s700
          %s702 = sshll.u32 %s692, 4
          %s703 = int_to_ptr.vmem [resolvable:$true] %s702
          %708 = dma.vmem_to_hbm [thread:$0]  %s703, 1024, %s701, %s689, 128, 128, 8
        $region59: #{tpu_custom_call.1} parent=39 // pred_fallthru
          _
      $region40: #{tpu_custom_call.1} parent=5 // pred_fallthru
        _
      %p709 = scmp.le.s32.totalorder 2, %s14
      // Predicated region
      $region60: #{tpu_custom_call.1} parent=5 // pred_check
        %p710 = pneg %p709
      $region61: #{tpu_custom_call.1} parent=5 // pred_check_branch
        %712 = sbr.rel (%p710) target = $region63
      $region62: #{tpu_custom_call.1} parent=5 // pred_region
        %s713 = ssub.s32 %s14, 2
        // Predicated region
        $region64: #{tpu_custom_call.1} parent=62 // pred_check
          %p714 = pneg %p176
        $region65: #{tpu_custom_call.1} parent=62 // pred_check_branch
          %716 = sbr.rel (%p714) target = $region67
        $region66: #{tpu_custom_call.1} parent=62 // pred_region
          %s717 = sand.u32 %s161, 1
          %s718 = scalar_lea.sflag [#allocation5], %s717
          %s719 = sand.u32 %s161, 1
          %s720 = smul.addr %s719, 64
          %s721 = scalar_lea.vmem [#allocation4], %s720
          %722 = dma.done %s718, 1024
        $region67: #{tpu_custom_call.1} parent=62 // pred_fallthru
          _
      $region63: #{tpu_custom_call.1} parent=5 // pred_fallthru
        _
    $region6: #{tpu_custom_call.1} parent=1 // loop_footer
      %s18 = sadd.s32 1, %s14
    $region7: #{tpu_custom_call.1} parent=1 // loop_footer_branch
      %13 = sbr.rel target = $region3
    $region8: #{tpu_custom_call.1} parent=1 // loop_exit
      _
    %723 = vsyncpa [#allocation5], 1
    %s724 = scalar_lea.sflag [#allocation5], 1
    %725 = vsyncpa %s724, 1

</llo_original>
